<compile_context>
chip_gen: v5e
topology: v5e:2x2
jax: 0.10.0
libtpu: 0.0.40
codegen_flags: <defaults>
</compile_context>

<pallas_src>
import functools

import jax
import jax.numpy as jnp
from jax.experimental import pallas as pl
from jax.experimental.pallas import tpu as pltpu


def _round_up(x, m):
    return (x + m - 1) // m * m


def _mlp_fused_kernel(*refs, num_layers, out_dims_pad):
    """refs = (x_ref, w0_ref, ..., w{L-1}_ref, b_all_ref, o_ref).

    Weights are pre-transposed/padded to (K_pad, N_pad) bf16; biases are packed
    f32 rows of b_all. All layers run back-to-back in VMEM: bf16 matmul on the
    MXU with f32 accumulation, bias+ReLU on the VPU in f32.
    """
    x_ref = refs[0]
    b_ref = refs[1 + num_layers]
    o_ref = refs[2 + num_layers]

    h = x_ref[...]                                    # bf16 (TM, K_pad)
    for layer in range(num_layers):
        w_ref = refs[1 + layer]
        np_ = out_dims_pad[layer]
        acc = jnp.dot(h, w_ref[...], preferred_element_type=jnp.float32)
        acc = acc + b_ref[layer:layer + 1, :np_]      # f32 bias, broadcast over rows
        if layer < num_layers - 1:                    # ReLU after all but last layer
            h = jnp.maximum(acc, 0.0).astype(jnp.bfloat16)
        else:
            o_ref[...] = acc.astype(o_ref.dtype)


def prepare_mlp_params(params, compute_dtype=jnp.bfloat16):
    """One-time parameter prep (do at init, NOT per forward call).

    Transposes PyTorch-layout (out,in) weights to (K_pad, N_pad) bf16 with
    feature dims zero-padded to lane multiples (128), and packs all biases
    into a single f32 (L, maxN_pad) operand.
    """
    num_layers = len(params)
    dims = [params[0][0].shape[1]] + [w.shape[0] for w, _ in params]
    dims_pad = [_round_up(max(d, 128), 128) for d in dims]
    max_np = max(dims_pad[1:])

    w_pads = []
    b_all = jnp.zeros((num_layers, max_np), jnp.float32)
    real_param_bytes = 0
    for li, (w, b) in enumerate(params):
        n, k = w.shape                                # PyTorch layout (out, in)
        kp, np_ = dims_pad[li], dims_pad[li + 1]
        w_kn = (jnp.zeros((kp, np_), compute_dtype)
                .at[:k, :n].set(w.T.astype(compute_dtype)))
        w_pads.append(w_kn)
        b_all = b_all.at[li, :n].set(b.astype(jnp.float32))
        real_param_bytes += n * k * jnp.dtype(compute_dtype).itemsize + n * 4

    return {
        "w_pads": w_pads,
        "b_all": b_all,
        "dims": dims,
        "dims_pad": dims_pad,
        "num_layers": num_layers,
        "real_param_bytes": real_param_bytes,
        "compute_dtype": compute_dtype,
    }


def mlp_forward(x, prep):
    """Fused MLP forward matching MLP.forward (ReLU between layers, none at end)."""
    num_layers = prep["num_layers"]
    dims, dims_pad = prep["dims"], prep["dims_pad"]
    compute_dtype = prep["compute_dtype"]
    M, K_in = x.shape
    assert K_in == dims[0]
    N_out, N_out_pad = dims[-1], dims_pad[-1]
    K_pad = dims_pad[0]

    # Batch tiling: one sublane-aligned block for small batches; 128-row tiles
    # otherwise. Marked "parallel" so v7x's second TensorCore gets work.
    if M <= 128:
        TM = _round_up(max(M, 8), 8)
    else:
        TM = 128
    M_pad = _round_up(M, TM)

    x_p = (jnp.zeros((M_pad, K_pad), compute_dtype)
           .at[:M, :K_in].set(x.astype(compute_dtype)))

    inputs = [x_p] + prep["w_pads"] + [prep["b_all"]]
    in_specs = (
        [pl.BlockSpec((TM, K_pad), lambda i: (i, 0))]
        + [pl.BlockSpec(w.shape, lambda i: (0, 0)) for w in prep["w_pads"]]
        + [pl.BlockSpec(prep["b_all"].shape, lambda i: (0, 0))]
    )
    out_specs = pl.BlockSpec((TM, N_out_pad), lambda i: (i, 0))

    # Real (unpadded) work for XLA's scheduler.
    flops = sum(2 * M * k * n for k, n in zip(dims[:-1], dims[1:]))
    bytes_accessed = (M * K_in * jnp.dtype(compute_dtype).itemsize
                      + prep["real_param_bytes"]
                      + M * N_out * jnp.dtype(x.dtype).itemsize)

    # VMEM budget: double-buffered x/out tiles + resident weights/biases +
    # f32 intermediates. Kept well under v7x's 64 MiB (32 MiB scoped default).
    itemsz = jnp.dtype(compute_dtype).itemsize
    vmem_est = (2 * TM * K_pad * itemsz
                + 2 * TM * N_out_pad * 4
                + sum(2 * w.size * itemsz for w in prep["w_pads"])
                + 2 * prep["b_all"].size * 4
                + 4 * TM * max(dims_pad) * 4)
    vmem_limit = int(min(max(2 * vmem_est, 8 << 20), 48 << 20))

    kernel = functools.partial(
        _mlp_fused_kernel,
        num_layers=num_layers,
        out_dims_pad=tuple(dims_pad[1:]),
    )

    out_p = pl.pallas_call(
        kernel,
        out_shape=jax.ShapeDtypeStruct((M_pad, N_out_pad), x.dtype),
        grid=(M_pad // TM,),
        in_specs=in_specs,
        out_specs=out_specs,
        compiler_params=pltpu.CompilerParams(
            dimension_semantics=("parallel",),
            vmem_limit_bytes=vmem_limit),
        cost_estimate=pl.CostEstimate(
            flops=flops, transcendentals=0, bytes_accessed=bytes_accessed),
    )(*inputs)

    return out_p[:M, :N_out]


def init_mlp_params(key, in_channels, hidden_channels, out_channels, num_layers=2):
    """Deterministic init matching the PyTorch module's layer shapes.
    Linear default init: U(-1/sqrt(fan_in), 1/sqrt(fan_in)) for both W and b.
    Weights stored PyTorch-style as (out_features, in_features)."""
    dims = [in_channels] + [hidden_channels] * (num_layers - 1) + [out_channels]
    params = []
    for fan_in, fan_out in zip(dims[:-1], dims[1:]):
        key, kw, kb = jax.random.split(key, 3)
        bound = 1.0 / jnp.sqrt(jnp.float32(fan_in))
        w = jax.random.uniform(kw, (fan_out, fan_in), jnp.float32, -bound, bound)
        b = jax.random.uniform(kb, (fan_out,), jnp.float32, -bound, bound)
        params.append((w, b))
    return params


def mlp_forward_ref_f32(x, params):
    """Pure-f32 reference (module semantics)."""
    for w, b in params[:-1]:
        x = jnp.maximum(x @ w.T + b, 0.0)
    w, b = params[-1]
    return x @ w.T + b


def mlp_forward_ref_bf16(x, params):
    """Reference emulating the kernel's numerics: bf16 matmul inputs, f32 accum."""
    h = x.astype(jnp.bfloat16)
    out = None
    for li, (w, b) in enumerate(params):
        acc = jnp.dot(h, w.T.astype(jnp.bfloat16),
                      preferred_element_type=jnp.float32) + b.astype(jnp.float32)
        if li < len(params) - 1:
            h = jnp.maximum(acc, 0.0).astype(jnp.bfloat16)
        else:
            out = acc
    return out


if __name__ == "__main__":
    key = jax.random.PRNGKey(0)
    batch, in_channels, hidden_channels, out_channels = 8, 16, 32, 8
    num_layers = 3

    key, kx = jax.random.split(key)
    x = jax.random.normal(kx, (batch, in_channels), jnp.float32)
    params = init_mlp_params(key, in_channels, hidden_channels, out_channels, num_layers)

    prep = prepare_mlp_params(params)          # one-time, outside the forward path
    out = mlp_forward(x, prep)
    out = jax.block_until_ready(out)

    assert out.shape == (batch, out_channels)
    ref_bf16 = mlp_forward_ref_bf16(x, params)     # same numerics as kernel
    ref_f32 = mlp_forward_ref_f32(x, params)       # module semantics, loose check
    assert jnp.allclose(out, ref_bf16, atol=1e-3, rtol=1e-3)
    assert jnp.allclose(out, ref_f32, atol=1e-1, rtol=1e-1)

    print("KERNEL_OK")
</pallas_src>

<mosaic_0001>
module attributes {stable_mosaic.version = 11 : i64} {
  func.func @_mlp_fused_kernel(%arg0: i32, %arg1: memref<8x128xbf16, #tpu.memory_space<vmem>>, %arg2: memref<128x128xbf16, #tpu.memory_space<vmem>>, %arg3: memref<128x128xbf16, #tpu.memory_space<vmem>>, %arg4: memref<128x128xbf16, #tpu.memory_space<vmem>>, %arg5: memref<3x128xf32, #tpu.memory_space<vmem>>, %arg6: memref<8x128xf32, #tpu.memory_space<vmem>>) attributes {dimension_semantics = [#tpu.dimension_semantics<parallel>], iteration_bounds = array<i64: 1>, scalar_prefetch = 0 : i64, scratch_operands = 0 : i64, tpu.core_type = #tpu.core_type<tc>, window_params = [{transform_indices = @transform_0, window_bounds = array<i64: 8, 128>}, {pipeline_mode = #tpu.pipeline_mode<synchronous>, transform_indices = @transform_1, window_bounds = array<i64: 128, 128>}, {pipeline_mode = #tpu.pipeline_mode<synchronous>, transform_indices = @transform_2, window_bounds = array<i64: 128, 128>}, {pipeline_mode = #tpu.pipeline_mode<synchronous>, transform_indices = @transform_3, window_bounds = array<i64: 128, 128>}, {pipeline_mode = #tpu.pipeline_mode<synchronous>, transform_indices = @transform_4, window_bounds = array<i64: 3, 128>}, {transform_indices = @transform_5, window_bounds = array<i64: 8, 128>}]} {
    %c0 = arith.constant 0 : index
    %c0_0 = arith.constant 0 : index
    %0 = vector.load %arg1[%c0, %c0_0] : memref<8x128xbf16, #tpu.memory_space<vmem>>, vector<8x128xbf16>
    %c0_1 = arith.constant 0 : index
    %c0_2 = arith.constant 0 : index
    %1 = vector.load %arg2[%c0_1, %c0_2] : memref<128x128xbf16, #tpu.memory_space<vmem>>, vector<128x128xbf16>
    %cst = arith.constant dense<0.000000e+00> : vector<8x128xf32>
    %2 = tpu.matmul %0, %1, %cst {dimension_numbers = #tpu.dot_dimension_numbers<[1], [0], [0], [1], [0, 0, 1, 1], [], []>} : vector<8x128xbf16>, vector<128x128xbf16>, vector<8x128xf32> -> vector<8x128xf32>
    %c0_3 = arith.constant 0 : index
    %c0_4 = arith.constant 0 : index
    %3 = vector.load %arg5[%c0_3, %c0_4] : memref<3x128xf32, #tpu.memory_space<vmem>>, vector<1x128xf32>
    %4 = vector.broadcast %3 : vector<1x128xf32> to vector<8x128xf32>
    %5 = arith.addf %2, %4 : vector<8x128xf32>
    %cst_5 = arith.constant 0.000000e+00 : f32
    %6 = vector.broadcast %cst_5 : f32 to vector<8x128xf32>
    %7 = arith.maximumf %5, %6 : vector<8x128xf32>
    %8 = arith.truncf %7 : vector<8x128xf32> to vector<8x128xbf16>
    %c0_6 = arith.constant 0 : index
    %c0_7 = arith.constant 0 : index
    %9 = vector.load %arg3[%c0_6, %c0_7] : memref<128x128xbf16, #tpu.memory_space<vmem>>, vector<128x128xbf16>
    %cst_8 = arith.constant dense<0.000000e+00> : vector<8x128xf32>
    %10 = tpu.matmul %8, %9, %cst_8 {dimension_numbers = #tpu.dot_dimension_numbers<[1], [0], [0], [1], [0, 0, 1, 1], [], []>} : vector<8x128xbf16>, vector<128x128xbf16>, vector<8x128xf32> -> vector<8x128xf32>
    %c1 = arith.constant 1 : index
    %c0_9 = arith.constant 0 : index
    %11 = vector.load %arg5[%c1, %c0_9] : memref<3x128xf32, #tpu.memory_space<vmem>>, vector<1x128xf32>
    %12 = vector.broadcast %11 : vector<1x128xf32> to vector<8x128xf32>
    %13 = arith.addf %10, %12 : vector<8x128xf32>
    %cst_10 = arith.constant 0.000000e+00 : f32
    %14 = vector.broadcast %cst_10 : f32 to vector<8x128xf32>
    %15 = arith.maximumf %13, %14 : vector<8x128xf32>
    %16 = arith.truncf %15 : vector<8x128xf32> to vector<8x128xbf16>
    %c0_11 = arith.constant 0 : index
    %c0_12 = arith.constant 0 : index
    %17 = vector.load %arg4[%c0_11, %c0_12] : memref<128x128xbf16, #tpu.memory_space<vmem>>, vector<128x128xbf16>
    %cst_13 = arith.constant dense<0.000000e+00> : vector<8x128xf32>
    %18 = tpu.matmul %16, %17, %cst_13 {dimension_numbers = #tpu.dot_dimension_numbers<[1], [0], [0], [1], [0, 0, 1, 1], [], []>} : vector<8x128xbf16>, vector<128x128xbf16>, vector<8x128xf32> -> vector<8x128xf32>
    %c2 = arith.constant 2 : index
    %c0_14 = arith.constant 0 : index
    %19 = vector.load %arg5[%c2, %c0_14] : memref<3x128xf32, #tpu.memory_space<vmem>>, vector<1x128xf32>
    %20 = vector.broadcast %19 : vector<1x128xf32> to vector<8x128xf32>
    %21 = arith.addf %18, %20 : vector<8x128xf32>
    %c0_15 = arith.constant 0 : index
    %c0_16 = arith.constant 0 : index
    %22 = vector.load %arg6[%c0_15, %c0_16] : memref<8x128xf32, #tpu.memory_space<vmem>>, vector<8x128xf32>
    tpu.vector_store %arg6[%c0_15, %c0_16], %21 {strides = array<i32>} : memref<8x128xf32, #tpu.memory_space<vmem>>, vector<8x128xf32>,
    return
  }
  func.func @transform_0(%arg0: i32) -> (i32, i32) {
    %c0_i32 = arith.constant 0 : i32
    %c0_i32_0 = arith.constant 0 : i32
    return %arg0, %c0_i32 : i32, i32
  }
  func.func @transform_1(%arg0: i32) -> (i32, i32) {
    %c0_i32 = arith.constant 0 : i32
    %c0_i32_0 = arith.constant 0 : i32
    %c0_i32_1 = arith.constant 0 : i32
    return %c0_i32, %c0_i32_0 : i32, i32
  }
  func.func @transform_2(%arg0: i32) -> (i32, i32) {
    %c0_i32 = arith.constant 0 : i32
    %c0_i32_0 = arith.constant 0 : i32
    %c0_i32_1 = arith.constant 0 : i32
    return %c0_i32, %c0_i32_0 : i32, i32
  }
  func.func @transform_3(%arg0: i32) -> (i32, i32) {
    %c0_i32 = arith.constant 0 : i32
    %c0_i32_0 = arith.constant 0 : i32
    %c0_i32_1 = arith.constant 0 : i32
    return %c0_i32, %c0_i32_0 : i32, i32
  }
  func.func @transform_4(%arg0: i32) -> (i32, i32) {
    %c0_i32 = arith.constant 0 : i32
    %c0_i32_0 = arith.constant 0 : i32
    %c0_i32_1 = arith.constant 0 : i32
    return %c0_i32, %c0_i32_0 : i32, i32
  }
  func.func @transform_5(%arg0: i32) -> (i32, i32) {
    %c0_i32 = arith.constant 0 : i32
    %c0_i32_0 = arith.constant 0 : i32
    return %arg0, %c0_i32 : i32, i32
  }
}

</mosaic_0001>

<llo_original>
// kernel: tpu_custom_call.1
$region0: #{tpu_custom_call.1}
  #allocation0 [shape = 'u32[]', space=smem, size = 0x4, offset = 0x4, fixed_abs, tag = 'smem constant byte address 0x4 - core index']
  #allocation1 [shape = 'u32[72,128]{1,0:T(1,128)}', space=vmem, size = 0x9000, scoped, tag = 'internal scratch']
  %s0 = inlined_call_operand.hbm [shape: bf16[8,128], index: 0, kind: input, shape index: {}]
  %s1 = inlined_call_operand.hbm [shape: bf16[128,128], index: 1, kind: input, shape index: {}]
  %s2 = inlined_call_operand.hbm [shape: bf16[128,128], index: 2, kind: input, shape index: {}]
  %s3 = inlined_call_operand.hbm [shape: bf16[128,128], index: 3, kind: input, shape index: {}]
  %s4 = inlined_call_operand.hbm [shape: f32[3,128], index: 4, kind: input, shape index: {}]
  %s5 = inlined_call_operand.hbm [shape: f32[8,128], index: 5, kind: output, shape index: {}]
  %s6 = sld [smem:[#allocation0]]
  $region50: #{tpu_custom_call.1} parent=0
    _
  %s8 = ssub.s32 1, %s6
  %s9 = scalar_select 0, %s8, %s6
  $region1: #{tpu_custom_call.1} parent=0
    #allocation2 [shape = 'u8[2048]{0}', space=vmem, size = 0x800, scoped, tag = 'input window, operand 0, single buffered']
    #allocation3 [shape = 's32[1]{0}', space=sflag, size = 0x4, scoped, tag = 'scoped memory for tpu_custom_call.1']
    #allocation4 [shape = 's32[1]{0}', space=sflag, size = 0x4, scoped, tag = 'scoped memory for tpu_custom_call.1']
    #allocation5 [shape = 'u8[32768]{0}', space=vmem, size = 0x8000, scoped, tag = 'input window, operand 1, single buffered']
    #allocation6 [shape = 's32[1]{0}', space=sflag, size = 0x4, scoped, tag = 'scoped memory for tpu_custom_call.1']
    #allocation7 [shape = 'u8[32768]{0}', space=vmem, size = 0x8000, scoped, tag = 'input window, operand 2, single buffered']
    #allocation8 [shape = 'u8[32768]{0}', space=vmem, size = 0x8000, scoped, tag = 'input window, operand 3, single buffered']
    #allocation9 [shape = 's32[1]{0}', space=sflag, size = 0x4, scoped, tag = 'scoped memory for tpu_custom_call.1']
    #allocation10 [shape = 'u8[2048]{0}', space=vmem, size = 0x800, scoped, tag = 'input window, operand 4, single buffered']
    #allocation11 [shape = 'u8[4096]{0}', space=vmem, size = 0x1000, scoped, tag = 'output window, operand 0, single buffered']
    %10 = vsyncpa [#allocation3], 0
    %11 = vsyncpa [#allocation6], 0
    %12 = vsyncpa [#allocation9], 0
    %13 = vsyncpa [#allocation4], 0
    // Predicated region
    $region2: #{tpu_custom_call.1} parent=1 // pred_check
      _
    $region3: #{tpu_custom_call.1} parent=1 // pred_check_branch
      %15 = sbr.rel (0) target = $region5
    $region4: #{tpu_custom_call.1} parent=1 // pred_region
      %17 = vsyncadd [#allocation3], 0
      %s19 = sshll.u32 %s0, 4
      %s20 = int_to_ptr.hbm [resolvable:$true] %s19
      %s21 = sshll.u32 [#allocation2], 4
      %s22 = int_to_ptr.vmem [resolvable:$true] %s21
      %24 = dma.hbm_to_vmem [thread:$0]  %s20, 64, %s22, [#allocation3]
    $region5: #{tpu_custom_call.1} parent=1 // pred_fallthru
      _
    // Predicated region
    $region6: #{tpu_custom_call.1} parent=1 // pred_check
      _
    $region7: #{tpu_custom_call.1} parent=1 // pred_check_branch
      %26 = sbr.rel (0) target = $region9
    $region8: #{tpu_custom_call.1} parent=1 // pred_region
      %28 = vsyncadd [#allocation6], 0
      %s29 = sshll.u32 %s1, 4
      %s30 = int_to_ptr.hbm [resolvable:$true] %s29
      %s31 = sshll.u32 [#allocation5], 4
      %s32 = int_to_ptr.vmem [resolvable:$true] %s31
      %37 = dma.hbm_to_vmem [thread:$0]  %s30, 1024, %s32, [#allocation6], 64, 64, 4
    $region9: #{tpu_custom_call.1} parent=1 // pred_fallthru
      _
    // Predicated region
    $region10: #{tpu_custom_call.1} parent=1 // pred_check
      _
    $region11: #{tpu_custom_call.1} parent=1 // pred_check_branch
      %39 = sbr.rel (0) target = $region13
    $region12: #{tpu_custom_call.1} parent=1 // pred_region
      %41 = vsyncadd [#allocation6], 0
      %s42 = sshll.u32 %s2, 4
      %s43 = int_to_ptr.hbm [resolvable:$true] %s42
      %s44 = sshll.u32 [#allocation7], 4
      %s45 = int_to_ptr.vmem [resolvable:$true] %s44
      %50 = dma.hbm_to_vmem [thread:$0]  %s43, 1024, %s45, [#allocation6], 64, 64, 4
    $region13: #{tpu_custom_call.1} parent=1 // pred_fallthru
      _
    // Predicated region
    $region14: #{tpu_custom_call.1} parent=1 // pred_check
      _
    $region15: #{tpu_custom_call.1} parent=1 // pred_check_branch
      %52 = sbr.rel (0) target = $region17
    $region16: #{tpu_custom_call.1} parent=1 // pred_region
      %54 = vsyncadd [#allocation9], 0
      %s55 = sshll.u32 %s3, 4
      %s56 = int_to_ptr.hbm [resolvable:$true] %s55
      %s57 = sshll.u32 [#allocation8], 4
      %s58 = int_to_ptr.vmem [resolvable:$true] %s57
      %63 = dma.hbm_to_vmem [thread:$0]  %s56, 1024, %s58, [#allocation9], 64, 64, 4
    $region17: #{tpu_custom_call.1} parent=1 // pred_fallthru
      _
    // Predicated region
    $region18: #{tpu_custom_call.1} parent=1 // pred_check
      _
    $region19: #{tpu_custom_call.1} parent=1 // pred_check_branch
      %65 = sbr.rel (0) target = $region21
    $region20: #{tpu_custom_call.1} parent=1 // pred_region
      %67 = vsyncadd [#allocation9], 0
      %s69 = sshll.u32 %s4, 4
      %s70 = int_to_ptr.hbm [resolvable:$true] %s69
      %s71 = sshll.u32 [#allocation10], 4
      %s72 = int_to_ptr.vmem [resolvable:$true] %s71
      %74 = dma.hbm_to_vmem [thread:$0]  %s70, 64, %s72, [#allocation9]
    $region21: #{tpu_custom_call.1} parent=1 // pred_fallthru
      _
    // Predicated region
    $region22: #{tpu_custom_call.1} parent=1 // pred_check
      _
    $region23: #{tpu_custom_call.1} parent=1 // pred_check_branch
      %76 = sbr.rel (0) target = $region25
    $region24: #{tpu_custom_call.1} parent=1 // pred_region
      %78 = dma.done [#allocation3], 64
    $region25: #{tpu_custom_call.1} parent=1 // pred_fallthru
      _
    // Predicated region
    $region26: #{tpu_custom_call.1} parent=1 // pred_check
      _
    $region27: #{tpu_custom_call.1} parent=1 // pred_check_branch
      %80 = sbr.rel (0) target = $region29
    $region28: #{tpu_custom_call.1} parent=1 // pred_region
      %82 = dma.done [#allocation6], 1024
    $region29: #{tpu_custom_call.1} parent=1 // pred_fallthru
      _
    // Predicated region
    $region30: #{tpu_custom_call.1} parent=1 // pred_check
      _
    $region31: #{tpu_custom_call.1} parent=1 // pred_check_branch
      %84 = sbr.rel (0) target = $region33
    $region32: #{tpu_custom_call.1} parent=1 // pred_region
      %86 = dma.done [#allocation6], 1024
    $region33: #{tpu_custom_call.1} parent=1 // pred_fallthru
      _
    // Predicated region
    $region34: #{tpu_custom_call.1} parent=1 // pred_check
      _
    $region35: #{tpu_custom_call.1} parent=1 // pred_check_branch
      %88 = sbr.rel (0) target = $region37
    $region36: #{tpu_custom_call.1} parent=1 // pred_region
      %90 = dma.done [#allocation9], 1024
    $region37: #{tpu_custom_call.1} parent=1 // pred_fallthru
      _
    // Predicated region
    $region38: #{tpu_custom_call.1} parent=1 // pred_check
      _
    $region39: #{tpu_custom_call.1} parent=1 // pred_check_branch
      %92 = sbr.rel (0) target = $region41
    $region40: #{tpu_custom_call.1} parent=1 // pred_region
      %94 = dma.done [#allocation9], 64
    $region41: #{tpu_custom_call.1} parent=1 // pred_fallthru
      _
    %v95 = vld [vmem:[#allocation2] sm:$0xf]
    %v96 = vld [vmem:[#allocation5] sm:$0xf]
    %v97 = vld [vmem:[#allocation5 + $0x4] sm:$0xf]
    %v98 = vld [vmem:[#allocation5 + $0x8] sm:$0xf]
    %v99 = vld [vmem:[#allocation5 + $0xc] sm:$0xf]
    %v100 = vld [vmem:[#allocation5 + $0x10] sm:$0xf]
    %v101 = vld [vmem:[#allocation5 + $0x14] sm:$0xf]
    %v102 = vld [vmem:[#allocation5 + $0x18] sm:$0xf]
    %v103 = vld [vmem:[#allocation5 + $0x1c] sm:$0xf]
    %v104 = vld [vmem:[#allocation5 + $0x20] sm:$0xf]
    %v105 = vld [vmem:[#allocation5 + $0x24] sm:$0xf]
    %v106 = vld [vmem:[#allocation5 + $0x28] sm:$0xf]
    %v107 = vld [vmem:[#allocation5 + $0x2c] sm:$0xf]
    %v108 = vld [vmem:[#allocation5 + $0x30] sm:$0xf]
    %v109 = vld [vmem:[#allocation5 + $0x34] sm:$0xf]
    %v110 = vld [vmem:[#allocation5 + $0x38] sm:$0xf]
    %v111 = vld [vmem:[#allocation5 + $0x3c] sm:$0xf]
    %v112 = vld [vmem:[#allocation10] sm:$0x1]
    %v113 = vperm.slane %v112, 0
    %v130 = vunpack.c.l.b16 %v96
    %v131 = vunpack.c.l.b16 %v97
    %v132 = vunpack.c.l.b16 %v98
    %v133 = vunpack.c.l.b16 %v99
    %v134 = vunpack.c.l.b16 %v100
    %v135 = vunpack.c.l.b16 %v101
    %v136 = vunpack.c.l.b16 %v102
    %v137 = vunpack.c.l.b16 %v103
    %v138 = vunpack.c.l.b16 %v104
    %v139 = vunpack.c.l.b16 %v105
    %v140 = vunpack.c.l.b16 %v106
    %v141 = vunpack.c.l.b16 %v107
    %v142 = vunpack.c.l.b16 %v108
    %v143 = vunpack.c.l.b16 %v109
    %v144 = vunpack.c.l.b16 %v110
    %v145 = vunpack.c.l.b16 %v111
    %v146 = vpack.c.b16 %v131, %v130
    %v147 = vpack.c.b16 %v133, %v132
    %v148 = vpack.c.b16 %v135, %v134
    %v149 = vpack.c.b16 %v137, %v136
    %v150 = vpack.c.b16 %v139, %v138
    %v151 = vpack.c.b16 %v141, %v140
    %v152 = vpack.c.b16 %v143, %v142
    %v153 = vpack.c.b16 %v145, %v144
    %162 = vmatpush.bf16.msra.mxu0 %v153
    %163 = vmatpush.bf16.msra.mxu0 %v152
    %164 = vmatpush.bf16.msra.mxu0 %v151
    %165 = vmatpush.bf16.msra.mxu0 %v150
    %166 = vmatpush.bf16.msra.mxu0 %v149
    %167 = vmatpush.bf16.msra.mxu0 %v148
    %168 = vmatpush.bf16.msra.mxu0 %v147
    %169 = vmatpush.bf16.msra.mxu0 %v146
    %170 = vmatmul.bf16.gmra.mxu0 %v95
    %v171 = vpop.f32.mrf.mxu0
    %v172 = vadd.f32 %v113, %v171
    %v173 = vpop.f32.mrf.mxu0
    %174 = vdwg.mxu0
    %v175 = vmax.f32 %v172, 0.0
    %v176 = vpack.c.bf16 %v175, %v175
    %v177 = vld [vmem:[#allocation7] sm:$0xf]
    %v178 = vld [vmem:[#allocation7 + $0x4] sm:$0xf]
    %v179 = vld [vmem:[#allocation7 + $0x8] sm:$0xf]
    %v180 = vld [vmem:[#allocation7 + $0xc] sm:$0xf]
    %v181 = vld [vmem:[#allocation7 + $0x10] sm:$0xf]
    %v182 = vld [vmem:[#allocation7 + $0x14] sm:$0xf]
    %v183 = vld [vmem:[#allocation7 + $0x18] sm:$0xf]
    %v184 = vld [vmem:[#allocation7 + $0x1c] sm:$0xf]
    %v185 = vld [vmem:[#allocation7 + $0x20] sm:$0xf]
    %v186 = vld [vmem:[#allocation7 + $0x24] sm:$0xf]
    %v187 = vld [vmem:[#allocation7 + $0x28] sm:$0xf]
    %v188 = vld [vmem:[#allocation7 + $0x2c] sm:$0xf]
    %v189 = vld [vmem:[#allocation7 + $0x30] sm:$0xf]
    %v190 = vld [vmem:[#allocation7 + $0x34] sm:$0xf]
    %v191 = vld [vmem:[#allocation7 + $0x38] sm:$0xf]
    %v192 = vld [vmem:[#allocation7 + $0x3c] sm:$0xf]
    %v193 = vld [vmem:[#allocation10 + $0x1] sm:$0x1]
    %v194 = vperm.slane %v193, 0
    %v211 = vunpack.c.l.b16 %v177
    %v212 = vunpack.c.l.b16 %v178
    %v213 = vunpack.c.l.b16 %v179
    %v214 = vunpack.c.l.b16 %v180
    %v215 = vunpack.c.l.b16 %v181
    %v216 = vunpack.c.l.b16 %v182
    %v217 = vunpack.c.l.b16 %v183
    %v218 = vunpack.c.l.b16 %v184
    %v219 = vunpack.c.l.b16 %v185
    %v220 = vunpack.c.l.b16 %v186
    %v221 = vunpack.c.l.b16 %v187
    %v222 = vunpack.c.l.b16 %v188
    %v223 = vunpack.c.l.b16 %v189
    %v224 = vunpack.c.l.b16 %v190
    %v225 = vunpack.c.l.b16 %v191
    %v226 = vunpack.c.l.b16 %v192
    %v227 = vpack.c.b16 %v212, %v211
    %v228 = vpack.c.b16 %v214, %v213
    %v229 = vpack.c.b16 %v216, %v215
    %v230 = vpack.c.b16 %v218, %v217
    %v231 = vpack.c.b16 %v220, %v219
    %v232 = vpack.c.b16 %v222, %v221
    %v233 = vpack.c.b16 %v224, %v223
    %v234 = vpack.c.b16 %v226, %v225
    %243 = vmatpush.bf16.msra.mxu0 %v234
    %244 = vmatpush.bf16.msra.mxu0 %v233
    %245 = vmatpush.bf16.msra.mxu0 %v232
    %246 = vmatpush.bf16.msra.mxu0 %v231
    %247 = vmatpush.bf16.msra.mxu0 %v230
    %248 = vmatpush.bf16.msra.mxu0 %v229
    %249 = vmatpush.bf16.msra.mxu0 %v228
    %250 = vmatpush.bf16.msra.mxu0 %v227
    %251 = vmatmul.bf16.gmra.mxu0 %v176
    %v252 = vpop.f32.mrf.mxu0
    %v253 = vadd.f32 %v194, %v252
    %v254 = vpop.f32.mrf.mxu0
    %255 = vdwg.mxu0
    %v256 = vmax.f32 %v253, 0.0
    %v257 = vpack.c.bf16 %v256, %v256
    %v258 = vld [vmem:[#allocation8] sm:$0xf]
    %v259 = vld [vmem:[#allocation8 + $0x4] sm:$0xf]
    %v260 = vld [vmem:[#allocation8 + $0x8] sm:$0xf]
    %v261 = vld [vmem:[#allocation8 + $0xc] sm:$0xf]
    %v262 = vld [vmem:[#allocation8 + $0x10] sm:$0xf]
    %v263 = vld [vmem:[#allocation8 + $0x14] sm:$0xf]
    %v264 = vld [vmem:[#allocation8 + $0x18] sm:$0xf]
    %v265 = vld [vmem:[#allocation8 + $0x1c] sm:$0xf]
    %v266 = vld [vmem:[#allocation8 + $0x20] sm:$0xf]
    %v267 = vld [vmem:[#allocation8 + $0x24] sm:$0xf]
    %v268 = vld [vmem:[#allocation8 + $0x28] sm:$0xf]
    %v269 = vld [vmem:[#allocation8 + $0x2c] sm:$0xf]
    %v270 = vld [vmem:[#allocation8 + $0x30] sm:$0xf]
    %v271 = vld [vmem:[#allocation8 + $0x34] sm:$0xf]
    %v272 = vld [vmem:[#allocation8 + $0x38] sm:$0xf]
    %v273 = vld [vmem:[#allocation8 + $0x3c] sm:$0xf]
    %v274 = vld [vmem:[#allocation10 + $0x2] sm:$0x1]
    %v275 = vperm.slane %v274, 0
    %v292 = vunpack.c.l.b16 %v258
    %v293 = vunpack.c.l.b16 %v259
    %v294 = vunpack.c.l.b16 %v260
    %v295 = vunpack.c.l.b16 %v261
    %v296 = vunpack.c.l.b16 %v262
    %v297 = vunpack.c.l.b16 %v263
    %v298 = vunpack.c.l.b16 %v264
    %v299 = vunpack.c.l.b16 %v265
    %v300 = vunpack.c.l.b16 %v266
    %v301 = vunpack.c.l.b16 %v267
    %v302 = vunpack.c.l.b16 %v268
    %v303 = vunpack.c.l.b16 %v269
    %v304 = vunpack.c.l.b16 %v270
    %v305 = vunpack.c.l.b16 %v271
    %v306 = vunpack.c.l.b16 %v272
    %v307 = vunpack.c.l.b16 %v273
    %v308 = vpack.c.b16 %v293, %v292
    %v309 = vpack.c.b16 %v295, %v294
    %v310 = vpack.c.b16 %v297, %v296
    %v311 = vpack.c.b16 %v299, %v298
    %v312 = vpack.c.b16 %v301, %v300
    %v313 = vpack.c.b16 %v303, %v302
    %v314 = vpack.c.b16 %v305, %v304
    %v315 = vpack.c.b16 %v307, %v306
    %324 = vmatpush.bf16.msra.mxu0 %v315
    %325 = vmatpush.bf16.msra.mxu0 %v314
    %326 = vmatpush.bf16.msra.mxu0 %v313
    %327 = vmatpush.bf16.msra.mxu0 %v312
    %328 = vmatpush.bf16.msra.mxu0 %v311
    %329 = vmatpush.bf16.msra.mxu0 %v310
    %330 = vmatpush.bf16.msra.mxu0 %v309
    %331 = vmatpush.bf16.msra.mxu0 %v308
    %332 = vmatmul.bf16.gmra.mxu0 %v257
    %v333 = vpop.f32.mrf.mxu0
    %v334 = vadd.f32 %v275, %v333
    %v335 = vpop.f32.mrf.mxu0
    %336 = vdwg.mxu0
    %337 = vst [vmem:[#allocation11] sm:$0xff] %v334
    // Predicated region
    $region42: #{tpu_custom_call.1} parent=1 // pred_check
      _
    $region43: #{tpu_custom_call.1} parent=1 // pred_check_branch
      %339 = sbr.rel (0) target = $region45
    $region44: #{tpu_custom_call.1} parent=1 // pred_region
      %341 = vsyncadd [#allocation4], 0
      %s343 = sshll.u32 [#allocation11], 4
      %s344 = int_to_ptr.vmem [resolvable:$true] %s343
      %s345 = sshll.u32 %s5, 4
      %s346 = int_to_ptr.hbm [resolvable:$true] %s345
      %348 = dma.vmem_to_hbm [thread:$0]  %s344, 128, %s346, [#allocation4]
    $region45: #{tpu_custom_call.1} parent=1 // pred_fallthru
      _
    // Predicated region
    $region46: #{tpu_custom_call.1} parent=1 // pred_check
      _
    $region47: #{tpu_custom_call.1} parent=1 // pred_check_branch
      %350 = sbr.rel (0) target = $region49
    $region48: #{tpu_custom_call.1} parent=1 // pred_region
      %352 = dma.done [#allocation4], 128
    $region49: #{tpu_custom_call.1} parent=1 // pred_fallthru
      _
    %353 = vsyncpa [#allocation3], 1
    %354 = vsyncpa [#allocation6], 1
    %355 = vsyncpa [#allocation9], 1
    %356 = vsyncpa [#allocation4], 1

</llo_original>
